<compile_context>
chip_gen: v5e
topology: v5e:2x2
jax: 0.10.0
libtpu: 0.0.40
codegen_flags: <defaults>
</compile_context>

<pallas_src>
import math
import jax
import jax.numpy as jnp
from jax.experimental import pallas as pl
from jax.experimental.pallas import tpu as pltpu

F_IN = 51          # real input features
F_OUT = 51         # real output features
F_PAD = 64         # lane-padded feature width used inside the kernel
HID = 64           # hidden width


def _elu(v):
    # ELU(alpha=1): x if x > 0 else exp(x) - 1  (clamp arg of exp to avoid overflow)
    return jnp.where(v > 0, v, jnp.exp(jnp.minimum(v, 0.0)) - 1.0)


def mlp_kernel(x_ref, w1_ref, b1_ref, w2_ref, b2_ref, w34_ref, b34_ref, mu_ref):
    x = x_ref[...]
    h = _elu(jnp.dot(x, w1_ref[...], preferred_element_type=jnp.float32) + b1_ref[...])
    h = _elu(jnp.dot(h, w2_ref[...], preferred_element_type=jnp.float32) + b2_ref[...])
    # layers 3 and 4 fused: (h @ w3 + b3) @ w4 + b4 == h @ (w3 @ w4) + (b3 @ w4 + b4)
    mu = jnp.dot(h, w34_ref[...], preferred_element_type=jnp.float32) + b34_ref[...]
    mu_ref[...] = mu.astype(mu_ref.dtype)


def _prep_padded_params(params):
    """Pad/fuse raw [in,out] params into kernel-friendly padded tensors."""
    # w1: [51,64] -> [64,64] (zero rows for the padded input features)
    w1p = jnp.zeros((F_PAD, HID), jnp.float32).at[:F_IN, :].set(params["w1"])
    b1 = params["b1"]                                   # [1,64]
    w2 = params["w2"]                                   # [64,64]
    b2 = params["b2"]                                   # [1,64]
    # fuse layer3 (64->64) with final_layer1 (64->51)
    w34 = params["w3"] @ params["w4"]                   # [64,51]
    b34 = params["b3"] @ params["w4"] + params["b4"]    # [1,51]
    # pad output feature dim 51 -> 64 with zero columns
    w34p = jnp.zeros((HID, F_PAD), jnp.float32).at[:, :F_OUT].set(w34)
    b34p = jnp.zeros((1, F_PAD), jnp.float32).at[:, :F_OUT].set(b34)
    return w1p, b1, w2, b2, w34p, b34p


def mymodel_forward(x, params, *, block_rows=512):
    """x: [B, 51] float32; params: dict with w1..w4 ([in,out]) and b1..b4 ([1,out])."""
    B = x.shape[0]
    w1p, b1, w2, b2, w34p, b34p = _prep_padded_params(params)

    # Pad batch to a multiple of the batch tile (tile is a multiple of 8 sublanes).
    b_pad8 = ((B + 7) // 8) * 8
    tb = min(block_rows, b_pad8)
    tb = ((tb + 7) // 8) * 8
    b_pad = ((b_pad8 + tb - 1) // tb) * tb
    grid = (b_pad // tb,)

    # Zero-pad x to [b_pad, 64].
    xp = jnp.zeros((b_pad, F_PAD), jnp.float32)
    xp = xp.at[:B, :F_IN].set(x)

    # Batch-tiled x / mu; weights use constant index maps -> resident in VMEM.
    x_spec = pl.BlockSpec((tb, F_PAD), lambda i: (i, 0))
    out_spec = pl.BlockSpec((tb, F_PAD), lambda i: (i, 0))

    def const_spec(shape):
        return pl.BlockSpec(shape, lambda i: (0, 0))

    weight_bytes = 4 * (w1p.size + b1.size + w2.size + b2.size + w34p.size + b34p.size)
    cost = pl.CostEstimate(
        flops=2 * b_pad * (F_PAD * HID + HID * HID + HID * F_PAD),
        transcendentals=2 * b_pad * HID,
        bytes_accessed=b_pad * F_PAD * 4 * 2 + weight_bytes,
    )

    mu_padded = pl.pallas_call(
        mlp_kernel,
        out_shape=jax.ShapeDtypeStruct((b_pad, F_PAD), jnp.float32),
        grid=grid,
        in_specs=[
            x_spec,
            const_spec((F_PAD, HID)), const_spec((1, HID)),
            const_spec((HID, HID)), const_spec((1, HID)),
            const_spec((HID, F_PAD)), const_spec((1, F_PAD)),
        ],
        out_specs=out_spec,
        compiler_params=pltpu.CompilerParams(dimension_semantics=("parallel",)),
        cost_estimate=cost,
    )(xp, w1p, b1, w2, b2, w34p, b34p)

    return mu_padded[:B, :F_OUT]


def init_params(key):
    """Deterministic init mimicking PyTorch nn.Linear default (U[-1/sqrt(fan_in), 1/sqrt(fan_in)])."""
    shapes = [
        ("w1", (51, 64)), ("b1", (1, 64)),
        ("w2", (64, 64)), ("b2", (1, 64)),
        ("w3", (64, 64)), ("b3", (1, 64)),
        ("w4", (64, 51)), ("b4", (1, 51)),
    ]
    params = {}
    keys = jax.random.split(key, len(shapes))
    for (name, shape), k in zip(shapes, keys):
        fan_in = shape[0] if name.startswith("w") else {"b1": 51, "b2": 64, "b3": 64, "b4": 64}[name]
        bound = 1.0 / math.sqrt(fan_in)
        params[name] = jax.random.uniform(k, shape, jnp.float32, -bound, bound)
    return params


def reference_forward(x, params):
    """Pure-JAX reference of the same (unfused, unpadded) forward pass."""
    def elu(v):
        return jnp.where(v > 0, v, jnp.exp(jnp.minimum(v, 0.0)) - 1.0)
    h = elu(x @ params["w1"] + params["b1"])
    h = elu(h @ params["w2"] + params["b2"])
    lin = h @ params["w3"] + params["b3"]
    return lin @ params["w4"] + params["b4"]


if __name__ == "__main__":
    key = jax.random.PRNGKey(0)
    pkey, xkey = jax.random.split(key)
    params = init_params(pkey)

    B = 8  # small batch
    x = jax.random.normal(xkey, (B, 51), jnp.float32)

    mu = mymodel_forward(x, params)
    jax.block_until_ready(mu)

    ref = reference_forward(x, params)
    assert mu.shape == (B, 51)
    assert jnp.allclose(mu, ref, atol=1e-5, rtol=1e-5), "Pallas output mismatch vs reference"

    print("KERNEL_OK")
</pallas_src>

<mosaic_0001>
module attributes {stable_mosaic.version = 11 : i64} {
  func.func @mlp_kernel(%arg0: i32, %arg1: memref<8x64xf32, #tpu.memory_space<vmem>>, %arg2: memref<64x64xf32, #tpu.memory_space<vmem>>, %arg3: memref<1x64xf32, #tpu.memory_space<vmem>>, %arg4: memref<64x64xf32, #tpu.memory_space<vmem>>, %arg5: memref<1x64xf32, #tpu.memory_space<vmem>>, %arg6: memref<64x64xf32, #tpu.memory_space<vmem>>, %arg7: memref<1x64xf32, #tpu.memory_space<vmem>>, %arg8: memref<8x64xf32, #tpu.memory_space<vmem>>) attributes {dimension_semantics = [#tpu.dimension_semantics<parallel>], iteration_bounds = array<i64: 1>, scalar_prefetch = 0 : i64, scratch_operands = 0 : i64, tpu.core_type = #tpu.core_type<tc>, window_params = [{transform_indices = @transform_0, window_bounds = array<i64: 8, 64>}, {pipeline_mode = #tpu.pipeline_mode<synchronous>, transform_indices = @transform_1, window_bounds = array<i64: 64, 64>}, {pipeline_mode = #tpu.pipeline_mode<synchronous>, transform_indices = @transform_2, window_bounds = array<i64: 1, 64>}, {pipeline_mode = #tpu.pipeline_mode<synchronous>, transform_indices = @transform_3, window_bounds = array<i64: 64, 64>}, {pipeline_mode = #tpu.pipeline_mode<synchronous>, transform_indices = @transform_4, window_bounds = array<i64: 1, 64>}, {pipeline_mode = #tpu.pipeline_mode<synchronous>, transform_indices = @transform_5, window_bounds = array<i64: 64, 64>}, {pipeline_mode = #tpu.pipeline_mode<synchronous>, transform_indices = @transform_6, window_bounds = array<i64: 1, 64>}, {transform_indices = @transform_7, window_bounds = array<i64: 8, 64>}]} {
    %c0 = arith.constant 0 : index
    %c0_0 = arith.constant 0 : index
    %0 = vector.load %arg1[%c0, %c0_0] : memref<8x64xf32, #tpu.memory_space<vmem>>, vector<8x64xf32>
    %c0_1 = arith.constant 0 : index
    %c0_2 = arith.constant 0 : index
    %1 = vector.load %arg2[%c0_1, %c0_2] : memref<64x64xf32, #tpu.memory_space<vmem>>, vector<64x64xf32>
    %cst = arith.constant dense<0.000000e+00> : vector<8x64xf32>
    %2 = tpu.matmul %0, %1, %cst {dimension_numbers = #tpu.dot_dimension_numbers<[1], [0], [0], [1], [0, 0, 1, 1], [], []>} : vector<8x64xf32>, vector<64x64xf32>, vector<8x64xf32> -> vector<8x64xf32>
    %c0_3 = arith.constant 0 : index
    %c0_4 = arith.constant 0 : index
    %3 = vector.load %arg3[%c0_3, %c0_4] : memref<1x64xf32, #tpu.memory_space<vmem>>, vector<1x64xf32>
    %4 = vector.broadcast %3 : vector<1x64xf32> to vector<8x64xf32>
    %5 = arith.addf %2, %4 : vector<8x64xf32>
    %cst_5 = arith.constant 0.000000e+00 : f32
    %6 = vector.broadcast %cst_5 : f32 to vector<8x64xf32>
    %7 = arith.cmpf ogt, %5, %6 : vector<8x64xf32>
    %cst_6 = arith.constant 0.000000e+00 : f32
    %8 = vector.broadcast %cst_6 : f32 to vector<8x64xf32>
    %9 = arith.minimumf %5, %8 : vector<8x64xf32>
    %10 = math.exp %9 : vector<8x64xf32>
    %cst_7 = arith.constant 1.000000e+00 : f32
    %11 = vector.broadcast %cst_7 : f32 to vector<8x64xf32>
    %12 = arith.subf %10, %11 : vector<8x64xf32>
    %13 = arith.select %7, %5, %12 : vector<8x64xi1>, vector<8x64xf32>
    %c0_8 = arith.constant 0 : index
    %c0_9 = arith.constant 0 : index
    %14 = vector.load %arg4[%c0_8, %c0_9] : memref<64x64xf32, #tpu.memory_space<vmem>>, vector<64x64xf32>
    %cst_10 = arith.constant dense<0.000000e+00> : vector<8x64xf32>
    %15 = tpu.matmul %13, %14, %cst_10 {dimension_numbers = #tpu.dot_dimension_numbers<[1], [0], [0], [1], [0, 0, 1, 1], [], []>} : vector<8x64xf32>, vector<64x64xf32>, vector<8x64xf32> -> vector<8x64xf32>
    %c0_11 = arith.constant 0 : index
    %c0_12 = arith.constant 0 : index
    %16 = vector.load %arg5[%c0_11, %c0_12] : memref<1x64xf32, #tpu.memory_space<vmem>>, vector<1x64xf32>
    %17 = vector.broadcast %16 : vector<1x64xf32> to vector<8x64xf32>
    %18 = arith.addf %15, %17 : vector<8x64xf32>
    %cst_13 = arith.constant 0.000000e+00 : f32
    %19 = vector.broadcast %cst_13 : f32 to vector<8x64xf32>
    %20 = arith.cmpf ogt, %18, %19 : vector<8x64xf32>
    %cst_14 = arith.constant 0.000000e+00 : f32
    %21 = vector.broadcast %cst_14 : f32 to vector<8x64xf32>
    %22 = arith.minimumf %18, %21 : vector<8x64xf32>
    %23 = math.exp %22 : vector<8x64xf32>
    %cst_15 = arith.constant 1.000000e+00 : f32
    %24 = vector.broadcast %cst_15 : f32 to vector<8x64xf32>
    %25 = arith.subf %23, %24 : vector<8x64xf32>
    %26 = arith.select %20, %18, %25 : vector<8x64xi1>, vector<8x64xf32>
    %c0_16 = arith.constant 0 : index
    %c0_17 = arith.constant 0 : index
    %27 = vector.load %arg6[%c0_16, %c0_17] : memref<64x64xf32, #tpu.memory_space<vmem>>, vector<64x64xf32>
    %cst_18 = arith.constant dense<0.000000e+00> : vector<8x64xf32>
    %28 = tpu.matmul %26, %27, %cst_18 {dimension_numbers = #tpu.dot_dimension_numbers<[1], [0], [0], [1], [0, 0, 1, 1], [], []>} : vector<8x64xf32>, vector<64x64xf32>, vector<8x64xf32> -> vector<8x64xf32>
    %c0_19 = arith.constant 0 : index
    %c0_20 = arith.constant 0 : index
    %29 = vector.load %arg7[%c0_19, %c0_20] : memref<1x64xf32, #tpu.memory_space<vmem>>, vector<1x64xf32>
    %30 = vector.broadcast %29 : vector<1x64xf32> to vector<8x64xf32>
    %31 = arith.addf %28, %30 : vector<8x64xf32>
    %c0_21 = arith.constant 0 : index
    %c0_22 = arith.constant 0 : index
    %32 = vector.load %arg8[%c0_21, %c0_22] : memref<8x64xf32, #tpu.memory_space<vmem>>, vector<8x64xf32>
    tpu.vector_store %arg8[%c0_21, %c0_22], %31 {strides = array<i32>} : memref<8x64xf32, #tpu.memory_space<vmem>>, vector<8x64xf32>,
    return
  }
  func.func @transform_0(%arg0: i32) -> (i32, i32) {
    %c0_i32 = arith.constant 0 : i32
    %c0_i32_0 = arith.constant 0 : i32
    return %arg0, %c0_i32 : i32, i32
  }
  func.func @transform_1(%arg0: i32) -> (i32, i32) {
    %c0_i32 = arith.constant 0 : i32
    %c0_i32_0 = arith.constant 0 : i32
    %c0_i32_1 = arith.constant 0 : i32
    return %c0_i32, %c0_i32_0 : i32, i32
  }
  func.func @transform_2(%arg0: i32) -> (i32, i32) {
    %c0_i32 = arith.constant 0 : i32
    %c0_i32_0 = arith.constant 0 : i32
    %c0_i32_1 = arith.constant 0 : i32
    return %c0_i32, %c0_i32_0 : i32, i32
  }
  func.func @transform_3(%arg0: i32) -> (i32, i32) {
    %c0_i32 = arith.constant 0 : i32
    %c0_i32_0 = arith.constant 0 : i32
    %c0_i32_1 = arith.constant 0 : i32
    return %c0_i32, %c0_i32_0 : i32, i32
  }
  func.func @transform_4(%arg0: i32) -> (i32, i32) {
    %c0_i32 = arith.constant 0 : i32
    %c0_i32_0 = arith.constant 0 : i32
    %c0_i32_1 = arith.constant 0 : i32
    return %c0_i32, %c0_i32_0 : i32, i32
  }
  func.func @transform_5(%arg0: i32) -> (i32, i32) {
    %c0_i32 = arith.constant 0 : i32
    %c0_i32_0 = arith.constant 0 : i32
    %c0_i32_1 = arith.constant 0 : i32
    return %c0_i32, %c0_i32_0 : i32, i32
  }
  func.func @transform_6(%arg0: i32) -> (i32, i32) {
    %c0_i32 = arith.constant 0 : i32
    %c0_i32_0 = arith.constant 0 : i32
    %c0_i32_1 = arith.constant 0 : i32
    return %c0_i32, %c0_i32_0 : i32, i32
  }
  func.func @transform_7(%arg0: i32) -> (i32, i32) {
    %c0_i32 = arith.constant 0 : i32
    %c0_i32_0 = arith.constant 0 : i32
    return %arg0, %c0_i32 : i32, i32
  }
}

</mosaic_0001>

<llo_original>
// kernel: tpu_custom_call.1
$region0: #{tpu_custom_call.1}
  #allocation0 [shape = 'u32[]', space=smem, size = 0x4, offset = 0x4, fixed_abs, tag = 'smem constant byte address 0x4 - core index']
  #allocation1 [shape = 'u32[72,128]{1,0:T(1,128)}', space=vmem, size = 0x9000, scoped, tag = 'internal scratch']
  %s0 = inlined_call_operand.hbm [shape: f32[8,64], index: 0, kind: input, shape index: {}]
  %s1 = inlined_call_operand.hbm [shape: f32[64,64], index: 1, kind: input, shape index: {}]
  %s2 = inlined_call_operand.vmem [shape: f32[1,64], index: 2, kind: input, shape index: {}]
  %s3 = inlined_call_operand.hbm [shape: f32[64,64], index: 3, kind: input, shape index: {}]
  %s4 = inlined_call_operand.vmem [shape: f32[1,64], index: 4, kind: input, shape index: {}]
  %s5 = inlined_call_operand.hbm [shape: f32[64,64], index: 5, kind: input, shape index: {}]
  %s6 = inlined_call_operand.vmem [shape: f32[1,64], index: 6, kind: input, shape index: {}]
  %s7 = inlined_call_operand.hbm [shape: f32[8,64], index: 7, kind: output, shape index: {}]
  %s8 = sld [smem:[#allocation0]]
  $region54: #{tpu_custom_call.1} parent=0
    _
  %s10 = ssub.s32 1, %s8
  %s11 = scalar_select 0, %s10, %s8
  $region1: #{tpu_custom_call.1} parent=0
    #allocation2 [shape = 'u8[4096]{0}', space=vmem, size = 0x1000, scoped, tag = 'input window, operand 0, single buffered']
    #allocation3 [shape = 's32[1]{0}', space=sflag, size = 0x4, scoped, tag = 'scoped memory for tpu_custom_call.1']
    #allocation4 [shape = 's32[1]{0}', space=sflag, size = 0x4, scoped, tag = 'scoped memory for tpu_custom_call.1']
    #allocation5 [shape = 'u8[32768]{0}', space=vmem, size = 0x8000, scoped, tag = 'input window, operand 1, single buffered']
    #allocation6 [shape = 's32[1]{0}', space=sflag, size = 0x4, scoped, tag = 'scoped memory for tpu_custom_call.1']
    #allocation7 [shape = 'u8[32768]{0}', space=vmem, size = 0x8000, scoped, tag = 'input window, operand 3, single buffered']
    #allocation8 [shape = 'u8[32768]{0}', space=vmem, size = 0x8000, scoped, tag = 'input window, operand 5, single buffered']
    #allocation9 [shape = 's32[1]{0}', space=sflag, size = 0x4, scoped, tag = 'scoped memory for tpu_custom_call.1']
    #allocation10 [shape = 'u8[4096]{0}', space=vmem, size = 0x1000, scoped, tag = 'output window, operand 0, single buffered']
    %12 = vsyncpa [#allocation3], 0
    %13 = vsyncpa [#allocation6], 0
    %14 = vsyncpa [#allocation9], 0
    %15 = vsyncpa [#allocation4], 0
    // Predicated region
    $region2: #{tpu_custom_call.1} parent=1 // pred_check
      _
    $region3: #{tpu_custom_call.1} parent=1 // pred_check_branch
      %17 = sbr.rel (0) target = $region5
    $region4: #{tpu_custom_call.1} parent=1 // pred_region
      %19 = vsyncadd [#allocation3], 0
      %s21 = sshll.u32 %s0, 4
      %s22 = int_to_ptr.hbm [resolvable:$true] %s21
      %s23 = sshll.u32 [#allocation2], 4
      %s24 = int_to_ptr.vmem [resolvable:$true] %s23
      %26 = dma.hbm_to_vmem [thread:$0]  %s22, 128, %s24, [#allocation3]
    $region5: #{tpu_custom_call.1} parent=1 // pred_fallthru
      _
    // Predicated region
    $region6: #{tpu_custom_call.1} parent=1 // pred_check
      _
    $region7: #{tpu_custom_call.1} parent=1 // pred_check_branch
      %28 = sbr.rel (0) target = $region9
    $region8: #{tpu_custom_call.1} parent=1 // pred_region
      %30 = vsyncadd [#allocation6], 0
      %s31 = sshll.u32 %s1, 4
      %s32 = int_to_ptr.hbm [resolvable:$true] %s31
      %s33 = sshll.u32 [#allocation5], 4
      %s34 = int_to_ptr.vmem [resolvable:$true] %s33
      %39 = dma.hbm_to_vmem [thread:$0]  %s32, 1024, %s34, [#allocation6], 128, 128, 8
    $region9: #{tpu_custom_call.1} parent=1 // pred_fallthru
      _
    // Predicated region
    $region10: #{tpu_custom_call.1} parent=1 // pred_check
      _
    $region11: #{tpu_custom_call.1} parent=1 // pred_check_branch
      %41 = sbr.rel (0) target = $region13
    $region12: #{tpu_custom_call.1} parent=1 // pred_region
      _
    $region13: #{tpu_custom_call.1} parent=1 // pred_fallthru
      _
    // Predicated region
    $region14: #{tpu_custom_call.1} parent=1 // pred_check
      _
    $region15: #{tpu_custom_call.1} parent=1 // pred_check_branch
      %43 = sbr.rel (0) target = $region17
    $region16: #{tpu_custom_call.1} parent=1 // pred_region
      %45 = vsyncadd [#allocation6], 0
      %s46 = sshll.u32 %s3, 4
      %s47 = int_to_ptr.hbm [resolvable:$true] %s46
      %s48 = sshll.u32 [#allocation7], 4
      %s49 = int_to_ptr.vmem [resolvable:$true] %s48
      %54 = dma.hbm_to_vmem [thread:$0]  %s47, 1024, %s49, [#allocation6], 128, 128, 8
    $region17: #{tpu_custom_call.1} parent=1 // pred_fallthru
      _
    // Predicated region
    $region18: #{tpu_custom_call.1} parent=1 // pred_check
      _
    $region19: #{tpu_custom_call.1} parent=1 // pred_check_branch
      %56 = sbr.rel (0) target = $region21
    $region20: #{tpu_custom_call.1} parent=1 // pred_region
      _
    $region21: #{tpu_custom_call.1} parent=1 // pred_fallthru
      _
    // Predicated region
    $region22: #{tpu_custom_call.1} parent=1 // pred_check
      _
    $region23: #{tpu_custom_call.1} parent=1 // pred_check_branch
      %58 = sbr.rel (0) target = $region25
    $region24: #{tpu_custom_call.1} parent=1 // pred_region
      %60 = vsyncadd [#allocation9], 0
      %s61 = sshll.u32 %s5, 4
      %s62 = int_to_ptr.hbm [resolvable:$true] %s61
      %s63 = sshll.u32 [#allocation8], 4
      %s64 = int_to_ptr.vmem [resolvable:$true] %s63
      %69 = dma.hbm_to_vmem [thread:$0]  %s62, 1024, %s64, [#allocation9], 128, 128, 8
    $region25: #{tpu_custom_call.1} parent=1 // pred_fallthru
      _
    // Predicated region
    $region26: #{tpu_custom_call.1} parent=1 // pred_check
      _
    $region27: #{tpu_custom_call.1} parent=1 // pred_check_branch
      %71 = sbr.rel (0) target = $region29
    $region28: #{tpu_custom_call.1} parent=1 // pred_region
      _
    $region29: #{tpu_custom_call.1} parent=1 // pred_fallthru
      _
    // Predicated region
    $region30: #{tpu_custom_call.1} parent=1 // pred_check
      _
    $region31: #{tpu_custom_call.1} parent=1 // pred_check_branch
      %73 = sbr.rel (0) target = $region33
    $region32: #{tpu_custom_call.1} parent=1 // pred_region
      %75 = dma.done [#allocation3], 128
    $region33: #{tpu_custom_call.1} parent=1 // pred_fallthru
      _
    // Predicated region
    $region34: #{tpu_custom_call.1} parent=1 // pred_check
      _
    $region35: #{tpu_custom_call.1} parent=1 // pred_check_branch
      %77 = sbr.rel (0) target = $region37
    $region36: #{tpu_custom_call.1} parent=1 // pred_region
      %79 = dma.done [#allocation6], 1024
    $region37: #{tpu_custom_call.1} parent=1 // pred_fallthru
      _
    // Predicated region
    $region38: #{tpu_custom_call.1} parent=1 // pred_check
      _
    $region39: #{tpu_custom_call.1} parent=1 // pred_check_branch
      %81 = sbr.rel (0) target = $region41
    $region40: #{tpu_custom_call.1} parent=1 // pred_region
      %83 = dma.done [#allocation6], 1024
    $region41: #{tpu_custom_call.1} parent=1 // pred_fallthru
      _
    // Predicated region
    $region42: #{tpu_custom_call.1} parent=1 // pred_check
      _
    $region43: #{tpu_custom_call.1} parent=1 // pred_check_branch
      %85 = sbr.rel (0) target = $region45
    $region44: #{tpu_custom_call.1} parent=1 // pred_region
      %87 = dma.done [#allocation9], 1024
    $region45: #{tpu_custom_call.1} parent=1 // pred_fallthru
      _
    %v88 = vld [vmem:[#allocation2] sm:$0xff]
    %v89 = vld [vmem:[#allocation5] sm:$0xff]
    %v90 = vld [vmem:[#allocation5 + $0x8] sm:$0xff]
    %v91 = vld [vmem:[#allocation5 + $0x10] sm:$0xff]
    %v92 = vld [vmem:[#allocation5 + $0x18] sm:$0xff]
    %v93 = vld [vmem:[#allocation5 + $0x20] sm:$0xff]
    %v94 = vld [vmem:[#allocation5 + $0x28] sm:$0xff]
    %v95 = vld [vmem:[#allocation5 + $0x30] sm:$0xff]
    %v96 = vld [vmem:[#allocation5 + $0x38] sm:$0xff]
    %v97 = vld [vmem:[%s2] sm:$0x1]
    %v99 = vperm.slane %v97, 0
    %vm101 = vcmask 523264
    %v103 = vsel %vm101, %v88, 0
    %105 = vmatpush.msra.mxu0 0.0
    %106 = vmatpush.msra.mxu0 0.0
    %107 = vmatpush.msra.mxu0 0.0
    %108 = vmatpush.msra.mxu0 0.0
    %109 = vmatpush.msra.mxu0 0.0
    %110 = vmatpush.msra.mxu0 0.0
    %111 = vmatpush.msra.mxu0 0.0
    %112 = vmatpush.msra.mxu0 0.0
    %113 = vmatpush.msra.mxu0 %v96
    %114 = vmatpush.msra.mxu0 %v95
    %115 = vmatpush.msra.mxu0 %v94
    %116 = vmatpush.msra.mxu0 %v93
    %117 = vmatpush.msra.mxu0 %v92
    %118 = vmatpush.msra.mxu0 %v91
    %119 = vmatpush.msra.mxu0 %v90
    %120 = vmatpush.msra.mxu0 %v89
    %121 = vmatmul.f32.gmra.mxu0 %v103
    %v122 = vpop.f32.mrf.mxu0
    %v123 = vadd.f32 %v99, %v122
    %124 = vdwg.mxu0
    %vm125 = vcmp.gt.f32.partialorder %v123, 0.0
    %v126 = vmin.f32 %v123, 0.0
    %v127 = vmul.f32 %v126, 1.442695
    %v128 = vpow.pop %v127
    %v129 = vsub.f32 %v128, 1.0
    %v130 = vsel %vm125, %v123, %v129
    %v131 = vld [vmem:[#allocation7] sm:$0xff]
    %v132 = vld [vmem:[#allocation7 + $0x8] sm:$0xff]
    %v133 = vld [vmem:[#allocation7 + $0x10] sm:$0xff]
    %v134 = vld [vmem:[#allocation7 + $0x18] sm:$0xff]
    %v135 = vld [vmem:[#allocation7 + $0x20] sm:$0xff]
    %v136 = vld [vmem:[#allocation7 + $0x28] sm:$0xff]
    %v137 = vld [vmem:[#allocation7 + $0x30] sm:$0xff]
    %v138 = vld [vmem:[#allocation7 + $0x38] sm:$0xff]
    %v139 = vld [vmem:[%s4] sm:$0x1]
    %v141 = vperm.slane %v139, 0
    %v144 = vsel %vm101, %v130, 0
    %146 = vmatpush.msra.mxu0 0.0
    %147 = vmatpush.msra.mxu0 0.0
    %148 = vmatpush.msra.mxu0 0.0
    %149 = vmatpush.msra.mxu0 0.0
    %150 = vmatpush.msra.mxu0 0.0
    %151 = vmatpush.msra.mxu0 0.0
    %152 = vmatpush.msra.mxu0 0.0
    %153 = vmatpush.msra.mxu0 0.0
    %154 = vmatpush.msra.mxu0 %v138
    %155 = vmatpush.msra.mxu0 %v137
    %156 = vmatpush.msra.mxu0 %v136
    %157 = vmatpush.msra.mxu0 %v135
    %158 = vmatpush.msra.mxu0 %v134
    %159 = vmatpush.msra.mxu0 %v133
    %160 = vmatpush.msra.mxu0 %v132
    %161 = vmatpush.msra.mxu0 %v131
    %162 = vmatmul.f32.gmra.mxu0 %v144
    %v163 = vpop.f32.mrf.mxu0
    %v164 = vadd.f32 %v141, %v163
    %165 = vdwg.mxu0
    %vm166 = vcmp.gt.f32.partialorder %v164, 0.0
    %v167 = vmin.f32 %v164, 0.0
    %v168 = vmul.f32 %v167, 1.442695
    %v169 = vpow.pop %v168
    %v170 = vsub.f32 %v169, 1.0
    %v171 = vsel %vm166, %v164, %v170
    %v172 = vld [vmem:[#allocation8] sm:$0xff]
    %v173 = vld [vmem:[#allocation8 + $0x8] sm:$0xff]
    %v174 = vld [vmem:[#allocation8 + $0x10] sm:$0xff]
    %v175 = vld [vmem:[#allocation8 + $0x18] sm:$0xff]
    %v176 = vld [vmem:[#allocation8 + $0x20] sm:$0xff]
    %v177 = vld [vmem:[#allocation8 + $0x28] sm:$0xff]
    %v178 = vld [vmem:[#allocation8 + $0x30] sm:$0xff]
    %v179 = vld [vmem:[#allocation8 + $0x38] sm:$0xff]
    %v180 = vld [vmem:[%s6] sm:$0x1]
    %v182 = vperm.slane %v180, 0
    %v185 = vsel %vm101, %v171, 0
    %187 = vmatpush.msra.mxu0 0.0
    %188 = vmatpush.msra.mxu0 0.0
    %189 = vmatpush.msra.mxu0 0.0
    %190 = vmatpush.msra.mxu0 0.0
    %191 = vmatpush.msra.mxu0 0.0
    %192 = vmatpush.msra.mxu0 0.0
    %193 = vmatpush.msra.mxu0 0.0
    %194 = vmatpush.msra.mxu0 0.0
    %195 = vmatpush.msra.mxu0 %v179
    %196 = vmatpush.msra.mxu0 %v178
    %197 = vmatpush.msra.mxu0 %v177
    %198 = vmatpush.msra.mxu0 %v176
    %199 = vmatpush.msra.mxu0 %v175
    %200 = vmatpush.msra.mxu0 %v174
    %201 = vmatpush.msra.mxu0 %v173
    %202 = vmatpush.msra.mxu0 %v172
    %203 = vmatmul.f32.gmra.mxu0 %v185
    %v204 = vpop.f32.mrf.mxu0
    %v205 = vadd.f32 %v182, %v204
    %206 = vdwg.mxu0
    %207 = vst.msk [vmem:[#allocation10] sm:$0xff] %vm101, %v205
    // Predicated region
    $region46: #{tpu_custom_call.1} parent=1 // pred_check
      _
    $region47: #{tpu_custom_call.1} parent=1 // pred_check_branch
      %209 = sbr.rel (0) target = $region49
    $region48: #{tpu_custom_call.1} parent=1 // pred_region
      %211 = vsyncadd [#allocation4], 0
      %s213 = sshll.u32 [#allocation10], 4
      %s214 = int_to_ptr.vmem [resolvable:$true] %s213
      %s215 = sshll.u32 %s7, 4
      %s216 = int_to_ptr.hbm [resolvable:$true] %s215
      %218 = dma.vmem_to_hbm [thread:$0]  %s214, 128, %s216, [#allocation4]
    $region49: #{tpu_custom_call.1} parent=1 // pred_fallthru
      _
    // Predicated region
    $region50: #{tpu_custom_call.1} parent=1 // pred_check
      _
    $region51: #{tpu_custom_call.1} parent=1 // pred_check_branch
      %220 = sbr.rel (0) target = $region53
    $region52: #{tpu_custom_call.1} parent=1 // pred_region
      %222 = dma.done [#allocation4], 128
    $region53: #{tpu_custom_call.1} parent=1 // pred_fallthru
      _
    %223 = vsyncpa [#allocation3], 1
    %224 = vsyncpa [#allocation6], 1
    %225 = vsyncpa [#allocation9], 1
    %226 = vsyncpa [#allocation4], 1

</llo_original>
